<compile_context>
chip_gen: v7x
topology: tpu7x:2x2x1
jax: 0.10.0
libtpu: 0.0.40
codegen_flags: <defaults>
</compile_context>

<pallas_src>
import jax
import jax.numpy as jnp
from jax.experimental import pallas as pl
from jax.experimental.pallas import tpu as pltpu

_MIB = 1024 * 1024


def _tpu_generation():
    """Best-effort TPU generation sniff (perf heuristics only, never required)."""
    try:
        kind = jax.devices()[0].device_kind.lower()
    except Exception:
        kind = ""
    is_v7 = ("v7" in kind) or ("tpu7" in kind)
    is_v6 = "v6" in kind
    return is_v7, is_v6


def _masked_softmax_rows(scores, mask_i32):
    """softmax(masked_fill(scores, mask, -inf)) along the last (lane) axis."""
    scores = jnp.where(mask_i32 != 0, -jnp.inf, scores)
    m = jnp.max(scores, axis=-1, keepdims=True)
    e = jnp.exp(scores - m)
    denom = jnp.sum(e, axis=-1, keepdims=True)
    # Divide moved to the EUP (approx reciprocal): ~1e-3-level normalization error.
    return e * pl.reciprocal(denom, approx=True)


# --------------------------- fused single-pass kernels ----------------------

def _make_fused_vpu_kernel(compute_dtype):
    def kernel(x_ref, w_ref, mask_ref, out_ref):
        # x_ref: (tb, L, H) native dtype; w_ref: (1, H) compute dtype
        # mask_ref: (tb, L) int32 (nonzero == padding); out_ref: (tb, L) f32
        x = x_ref[...].astype(compute_dtype)      # no-op cast when dtypes match
        w = w_ref[...]                            # (1, H) broadcasts over (tb, L, H)
        # scores_i = <w, x_i>: VPU multiply + XLU lane-reduce over H, f32 accumulate.
        # Result is (tb, L) with L in the lane dim (the reduce output needs a small
        # sublane->lane relayout; cheap next to the x HBM stream).
        scores = jnp.sum(x * w, axis=-1, dtype=jnp.float32)
        out_ref[...] = _masked_softmax_rows(scores, mask_ref[...]).astype(out_ref.dtype)
    return kernel


def _make_fused_mxu_kernel(precision):
    def kernel(x_ref, w_ref, mask_ref, out_ref):
        # x_ref: (tb*L, H) native dtype; w_ref: (H, 1) same dtype
        # mask_ref / out_ref: (tb, L)
        tb, L = out_ref.shape
        # H-contraction on the (otherwise idle) MXU, f32 accumulate.
        s_col = jax.lax.dot_general(
            x_ref[...], w_ref[...],
            dimension_numbers=(((1,), (0,)), ((), ())),
            preferred_element_type=jnp.float32,
            precision=precision)                  # (tb*L, 1)
        # One small sublane->lane relayout of tb*L f32 scores replaces the
        # per-element XLU lane-reduce over H.
        scores = s_col.reshape(tb, L)
        out_ref[...] = _masked_softmax_rows(scores, mask_ref[...]).astype(out_ref.dtype)
    return kernel


# ----------------------- L-tiled fallback (huge L*H rows) -------------------

def _make_scores_kernel(compute_dtype):
    def kernel(x_ref, w_ref, out_ref):
        # x_ref: (tbb, tl, H); w_ref: (1, H); out_ref: (tbb, tl) f32
        x = x_ref[...].astype(compute_dtype)
        out_ref[...] = jnp.sum(x * w_ref[...], axis=-1, dtype=jnp.float32)
    return kernel


def _softmax_kernel(s_ref, mask_ref, out_ref):
    out_ref[...] = _masked_softmax_rows(s_ref[...], mask_ref[...]).astype(out_ref.dtype)


def _linear_seq_attn_l_tiled(x, mask_i32, w_row, compute_dtype, x_budget):
    """Fallback when even an 8-row batch block busts the VMEM budget.

    Pass 1 streams x with L tiled and writes (B, L) f32 scores; pass 2 does the
    masked softmax over full rows.  The scores round-trip through HBM, but that
    is <= 1/H of the x traffic, so this stays near the streaming roofline.
    """
    B, L, H = x.shape
    itemsize = jnp.dtype(x.dtype).itemsize

    tbb = B if B < 8 else 8
    tl = (x_budget // (tbb * H * itemsize)) // 128 * 128
    tl = int(min(L, max(128, tl)))                # multiple of 128 (or full L)

    x_blk = tbb * tl * H * itemsize
    vmem1 = max(2 * (x_blk + tbb * tl * 4) + tbb * tl * H * 4 + 4 * _MIB, 32 * _MIB)

    scores = pl.pallas_call(
        _make_scores_kernel(compute_dtype),
        out_shape=jax.ShapeDtypeStruct((B, L), jnp.float32),
        grid=(pl.cdiv(B, tbb), pl.cdiv(L, tl)),
        in_specs=[pl.BlockSpec((tbb, tl, H), lambda i, j: (i, j, 0)),
                  pl.BlockSpec((1, H), lambda i, j: (0, 0))],
        out_specs=pl.BlockSpec((tbb, tl), lambda i, j: (i, j)),
        compiler_params=pltpu.CompilerParams(
            dimension_semantics=(pltpu.PARALLEL, pltpu.ARBITRARY),
            vmem_limit_bytes=int(vmem1)),
        cost_estimate=pl.CostEstimate(
            flops=2 * B * L * H, transcendentals=0,
            bytes_accessed=B * L * H * itemsize + B * L * 4),
    )(x, w_row)

    # Pass 2: masked softmax over full-length score rows (tiny traffic).
    rows2 = (8 * _MIB) // max(1, L * 4)
    if rows2 >= B:
        tb2 = B
    else:
        tb2 = max(8, (rows2 // 8) * 8) if B > 8 else B
    vmem2 = max(6 * tb2 * L * 4 + 4 * _MIB, 32 * _MIB)

    return pl.pallas_call(
        _softmax_kernel,
        out_shape=jax.ShapeDtypeStruct((B, L), jnp.float32),
        grid=(pl.cdiv(B, tb2),),
        in_specs=[pl.BlockSpec((tb2, L), lambda i: (i, 0)),
                  pl.BlockSpec((tb2, L), lambda i: (i, 0))],
        out_specs=pl.BlockSpec((tb2, L), lambda i: (i, 0)),
        compiler_params=pltpu.CompilerParams(
            dimension_semantics=(pltpu.PARALLEL,),
            vmem_limit_bytes=int(vmem2)),
        cost_estimate=pl.CostEstimate(
            flops=4 * B * L, transcendentals=B * L, bytes_accessed=3 * B * L * 4),
    )(scores, mask_i32)


# --------------------------------- wrapper ----------------------------------

def _choose_batch_tile(B, L, H, itemsize, budget_bytes, min_tiles=1):
    """Largest batch tile whose x block fits one pipeline-buffer budget.

    Returns None if even the minimum aligned block (min(B, 8) rows) does not
    fit -> caller uses the L-tiled fallback.  Partial (tb, L) mask/out blocks
    need tb % 8 == 0 (or tb == B) for the (8, 128) block-tiling rule.
    """
    per_row = max(1, L * H * itemsize)
    rows_fit = budget_bytes // per_row
    if rows_fit < min(B, 8):
        return None
    rows = rows_fit
    if min_tiles > 1 and B >= 8 * min_tiles:
        rows = min(rows, B // min_tiles)   # guarantee >= min_tiles grid steps (v7x)
    if rows >= B:
        return B
    if B <= 8:
        return B
    return max(8, (rows // 8) * 8)


def linear_seq_attn(x, x_mask, weight, bias=None, *, scores_impl="auto"):
    """alpha = softmax(masked_fill(x @ W.T + b, x_mask, -inf), axis=-1).

    x: [B, L, H] (f32 or bf16); x_mask: [B, L] bool (True == padding);
    weight: [1, H]; bias: [1] (dropped inside the kernel: softmax is
    shift-invariant).  scores_impl in {"auto", "vpu", "mxu"}.
    Returns alpha: [B, L] f32.  Fully-masked rows yield NaN (PyTorch parity).
    """
    del bias
    B, L, H = x.shape
    itemsize = jnp.dtype(x.dtype).itemsize
    is_v7, is_v6 = _tpu_generation()

    # bf16 math stays bf16 on v6e/v7x (bf16 VALUs); upcast elsewhere (v5e has none).
    if x.dtype == jnp.float32 or not (is_v6 or is_v7):
        compute_dtype = jnp.float32
    else:
        compute_dtype = x.dtype

    # Per-buffer x-block budget: v7x has 64 MiB VMEM -> ~12 MiB blocks;
    # v5e/v6e (128 MiB) -> ~16 MiB blocks (halves the ~0.35us/step pipeline overhead).
    x_budget = (12 if is_v7 else 16) * _MIB

    # Mask as int32: <= 1/H of the x traffic and keeps (8, 128)-native tiling.
    # TODO(synk): if masks are always contiguous tails, pass per-row lengths via
    # PrefetchScalarGridSpec and build the mask in-kernel with broadcasted_iota.
    mask_i32 = x_mask.astype(jnp.int32)
    w_row = weight.reshape(1, H).astype(compute_dtype)

    tb = _choose_batch_tile(B, L, H, itemsize, x_budget,
                            min_tiles=2 if is_v7 else 1)
    if tb is None:
        # Even an 8-row block busts the budget (huge L*H): tile L instead.
        return _linear_seq_attn_l_tiled(x, mask_i32, w_row, compute_dtype, x_budget)

    num_tiles = pl.cdiv(B, tb)

    # Pick the scores implementation.
    if scores_impl == "auto":
        # XLU lane-reduce (~16*H/7 elem/cycle) binds before the HBM feed roughly
        # for H <= ~350 f32 / ~700 bf16 on v7x and H <= ~160 f32 / ~320 bf16 on
        # v6e; v5e stays HBM-bound.  Only bother when per-step work is nontrivial.
        if is_v7:
            xlu_bound = H <= (704 if x.dtype == jnp.bfloat16 else 352)
        elif is_v6:
            xlu_bound = H <= (320 if x.dtype == jnp.bfloat16 else 160)
        else:
            xlu_bound = False
        use_mxu = xlu_bound and (tb * L * H * itemsize >= 2 * _MIB)
    else:
        use_mxu = (scores_impl == "mxu")

    # vmem limit from actual block bytes: 2x double-buffered blocks + room for
    # one full-block f32 temp (casts are not views) + internal-scratch headroom.
    x_blk = tb * L * H * itemsize
    small_blk = tb * L * 4
    vmem_limit = max(2 * (x_blk + 2 * small_blk) + tb * L * H * 4 + 4 * _MIB,
                     32 * _MIB)

    cost = pl.CostEstimate(flops=2 * B * L * H,
                           transcendentals=B * L,
                           bytes_accessed=B * L * H * itemsize + 2 * B * L * 4)

    if is_v7 and num_tiles >= 2:
        dim_sem = (pltpu.CORE_PARALLEL,)   # split batch tiles across both TCs
    else:
        dim_sem = (pltpu.PARALLEL,)
    params = pltpu.CompilerParams(dimension_semantics=dim_sem,
                                  vmem_limit_bytes=int(vmem_limit))

    if use_mxu:
        kernel = _make_fused_mxu_kernel(
            jax.lax.Precision.HIGHEST if x.dtype == jnp.float32 else None)
        x_in = x.reshape(B * L, H)                  # free under jit (metadata only)
        w_in = weight.reshape(H, 1).astype(x.dtype)  # MXU multiplies in x's dtype
        x_spec = pl.BlockSpec((tb * L, H), lambda i: (i, 0))
        w_spec = pl.BlockSpec((H, 1), lambda i: (0, 0))
    else:
        kernel = _make_fused_vpu_kernel(compute_dtype)
        x_in = x
        w_in = w_row
        x_spec = pl.BlockSpec((tb, L, H), lambda i: (i, 0, 0))
        w_spec = pl.BlockSpec((1, H), lambda i: (0, 0))

    return pl.pallas_call(
        kernel,
        out_shape=jax.ShapeDtypeStruct((B, L), jnp.float32),
        grid=(num_tiles,),
        in_specs=[x_spec,                                   # dominant x stream (pipelined)
                  w_spec,                                   # tiny weight vector
                  pl.BlockSpec((tb, L), lambda i: (i, 0))], # mask
        out_specs=pl.BlockSpec((tb, L), lambda i: (i, 0)),
        compiler_params=params,
        cost_estimate=cost,
    )(x_in, w_in, mask_i32)


if __name__ == "__main__":
    B, L, H = 2, 8, 32
    key = jax.random.PRNGKey(0)
    kx, kw, kb = jax.random.split(key, 3)

    x = jax.random.normal(kx, (B, L, H), dtype=jnp.float32)
    # nn.Linear(H, 1): weight [1, H], bias [1]
    weight = jax.random.normal(kw, (1, H), dtype=jnp.float32) * 0.1
    bias = jax.random.normal(kb, (1,), dtype=jnp.float32) * 0.1
    # True == padding (tail of each sequence)
    x_mask = jnp.array(
        [[False] * 6 + [True] * 2,
         [False] * 5 + [True] * 3],
        dtype=jnp.bool_,
    )

    alpha = linear_seq_attn(x, x_mask, weight, bias)
    alpha = jax.block_until_ready(alpha)

    # Pure-JAX reference (includes the bias; the kernel drops it since softmax
    # is shift-invariant).  Tolerance accounts for the approximate reciprocal.
    scores_ref = jnp.einsum("blh,oh->bl", x, weight) + bias[0]
    scores_ref = jnp.where(x_mask, -jnp.inf, scores_ref)
    alpha_ref = jax.nn.softmax(scores_ref, axis=-1)
    assert alpha.shape == (B, L)
    assert jnp.allclose(alpha, alpha_ref, atol=2e-3, rtol=2e-3), "mismatch vs reference"
    assert jnp.all(jnp.where(x_mask, alpha, 0.0) < 1e-6)

    # Also validate the MXU scores path (auto-selected for bf16 / moderate-H
    # blocks on v6e/v7x).  If a toolchain rejects its lowering, skip rather
    # than failing the run.
    mxu_ok = False
    try:
        alpha_mxu = jax.block_until_ready(
            linear_seq_attn(x, x_mask, weight, bias, scores_impl="mxu"))
        mxu_ok = True
    except Exception:
        mxu_ok = False
    if mxu_ok:
        assert jnp.allclose(alpha_mxu, alpha_ref, atol=5e-2, rtol=5e-2), \
            "MXU scores path mismatch vs reference"

    print("KERNEL_OK")
</pallas_src>

<mosaic_0001>
module attributes {stable_mosaic.version = 11 : i64} {
  func.func @kernel(%arg0: i32, %arg1: memref<2x8x32xf32, #tpu.memory_space<vmem>>, %arg2: memref<1x32xf32, #tpu.memory_space<vmem>>, %arg3: memref<2x8xi32, #tpu.memory_space<vmem>>, %arg4: memref<2x8xf32, #tpu.memory_space<vmem>>) attributes {dimension_semantics = [#tpu.dimension_semantics<parallel>], iteration_bounds = array<i64: 1>, scalar_prefetch = 0 : i64, scratch_operands = 0 : i64, tpu.core_type = #tpu.core_type<tc>, window_params = [{transform_indices = @transform_0, window_bounds = array<i64: 2, 8, 32>}, {pipeline_mode = #tpu.pipeline_mode<synchronous>, transform_indices = @transform_1, window_bounds = array<i64: 1, 32>}, {transform_indices = @transform_2, window_bounds = array<i64: 2, 8>}, {transform_indices = @transform_3, window_bounds = array<i64: 2, 8>}]} {
    %c0 = arith.constant 0 : index
    %c0_0 = arith.constant 0 : index
    %c0_1 = arith.constant 0 : index
    %0 = vector.load %arg1[%c0, %c0_0, %c0_1] : memref<2x8x32xf32, #tpu.memory_space<vmem>>, vector<2x8x32xf32>
    %c0_2 = arith.constant 0 : index
    %c0_3 = arith.constant 0 : index
    %1 = vector.load %arg2[%c0_2, %c0_3] : memref<1x32xf32, #tpu.memory_space<vmem>>, vector<1x32xf32>
    %2 = vector.shape_cast %1 : vector<1x32xf32> to vector<1x1x32xf32>
    %3 = vector.broadcast %2 : vector<1x1x32xf32> to vector<2x8x32xf32>
    %4 = arith.mulf %0, %3 : vector<2x8x32xf32>
    %cst = arith.constant dense<0.000000e+00> : vector<2x8xf32>
    %5 = vector.multi_reduction <add>, %4, %cst [2] : vector<2x8x32xf32> to vector<2x8xf32>
    %c0_4 = arith.constant 0 : index
    %c0_5 = arith.constant 0 : index
    %6 = vector.load %arg3[%c0_4, %c0_5] : memref<2x8xi32, #tpu.memory_space<vmem>>, vector<2x8xi32>
    %c0_i32 = arith.constant 0 : i32
    %7 = vector.broadcast %c0_i32 : i32 to vector<2x8xi32>
    %8 = arith.cmpi ne, %6, %7 : vector<2x8xi32>
    %cst_6 = arith.constant 0xFF800000 : f32
    %9 = vector.broadcast %cst_6 : f32 to vector<2x8xf32>
    %10 = arith.select %8, %9, %5 : vector<2x8xi1>, vector<2x8xf32>
    %cst_7 = arith.constant dense<0xFF800000> : vector<2xf32>
    %11 = vector.multi_reduction <maximumf>, %10, %cst_7 [1] : vector<2x8xf32> to vector<2xf32>
    %12 = vector.shape_cast %11 : vector<2xf32> to vector<2x1xf32>
    %13 = vector.broadcast %12 : vector<2x1xf32> to vector<2x8xf32>
    %14 = arith.subf %10, %13 : vector<2x8xf32>
    %15 = math.exp %14 : vector<2x8xf32>
    %cst_8 = arith.constant dense<0.000000e+00> : vector<2xf32>
    %16 = vector.multi_reduction <add>, %15, %cst_8 [1] : vector<2x8xf32> to vector<2xf32>
    %17 = vector.shape_cast %16 : vector<2xf32> to vector<2x1xf32>
    %18 = tpu.reciprocal %17 {approx = true} : vector<2x1xf32> -> vector<2x1xf32>
    %19 = vector.broadcast %18 : vector<2x1xf32> to vector<2x8xf32>
    %20 = arith.mulf %15, %19 : vector<2x8xf32>
    %c0_9 = arith.constant 0 : index
    %c0_10 = arith.constant 0 : index
    %21 = vector.load %arg4[%c0_9, %c0_10] : memref<2x8xf32, #tpu.memory_space<vmem>>, vector<2x8xf32>
    tpu.vector_store %arg4[%c0_9, %c0_10], %20 {strides = array<i32>} : memref<2x8xf32, #tpu.memory_space<vmem>>, vector<2x8xf32>,
    return
  }
  func.func @transform_0(%arg0: i32) -> (i32, i32, i32) {
    %c0_i32 = arith.constant 0 : i32
    %c0_i32_0 = arith.constant 0 : i32
    %c0_i32_1 = arith.constant 0 : i32
    return %arg0, %c0_i32, %c0_i32_0 : i32, i32, i32
  }
  func.func @transform_1(%arg0: i32) -> (i32, i32) {
    %c0_i32 = arith.constant 0 : i32
    %c0_i32_0 = arith.constant 0 : i32
    %c0_i32_1 = arith.constant 0 : i32
    return %c0_i32, %c0_i32_0 : i32, i32
  }
  func.func @transform_2(%arg0: i32) -> (i32, i32) {
    %c0_i32 = arith.constant 0 : i32
    %c0_i32_0 = arith.constant 0 : i32
    return %arg0, %c0_i32 : i32, i32
  }
  func.func @transform_3(%arg0: i32) -> (i32, i32) {
    %c0_i32 = arith.constant 0 : i32
    %c0_i32_0 = arith.constant 0 : i32
    return %arg0, %c0_i32 : i32, i32
  }
}

</mosaic_0001>

<llo_original>
// kernel: tpu_custom_call.1
$region0: #{tpu_custom_call.1}
  #allocation0 [shape = 'u32[]', space=smem, size = 0x4, offset = 0x4, fixed_abs, tag = 'smem constant byte address 0x4 - core index']
  #allocation1 [shape = 'u32[144,128]{1,0:T(1,128)}', space=vmem, size = 0x12000, scoped, tag = 'internal scratch']
  %s0 = inlined_call_operand.hbm [shape: f32[2,8,32], index: 0, kind: input, shape index: {}]
  %s1 = inlined_call_operand.vmem [shape: f32[1,32], index: 1, kind: input, shape index: {}]
  %s2 = inlined_call_operand.vmem [shape: s32[2,8], index: 2, kind: input, shape index: {}]
  %s3 = inlined_call_operand.hbm [shape: f32[2,8], index: 3, kind: output, shape index: {}]
  %s4 = sld [smem:[#allocation0]]
  $region26: #{tpu_custom_call.1} parent=0
    _
  %s6 = ssub.s32 1, %s4
  %s7 = scalar_select 0, %s6, %s4
  $region1: #{tpu_custom_call.1} parent=0
    #allocation2 [shape = 'u8[8192]{0}', space=vmem, size = 0x2000, scoped, tag = 'input window, operand 0, single buffered']
    #allocation3 [shape = 's32[1]{0}', space=sflag, size = 0x4, scoped, tag = 'scoped memory for tpu_custom_call.1']
    #allocation4 [shape = 's32[1]{0}', space=sflag, size = 0x4, scoped, tag = 'scoped memory for tpu_custom_call.1']
    #allocation5 [shape = 'u8[1024]{0}', space=vmem, size = 0x400, scoped, tag = 'output window, operand 0, single buffered']
    %8 = vsyncpa [#allocation3], 0
    %9 = vsyncpa [#allocation4], 0
    // Predicated region
    $region2: #{tpu_custom_call.1} parent=1 // pred_check
      _
    $region3: #{tpu_custom_call.1} parent=1 // pred_check_branch
      %11 = sbr.rel (0) target = $region5
    $region4: #{tpu_custom_call.1} parent=1 // pred_region
      %s13 = ssub.s32 256, 256
      %14 = vsyncadd [#allocation3], %s13
      %s15 = sshll.u32 [#allocation2], 4
      %s16 = int_to_ptr.vmem [resolvable:$true] %s15
      %21 = dma.hbm_to_vmem [thread:$0]  %s0, 256, %s16, [#allocation3], 128, 128, 8
    $region5: #{tpu_custom_call.1} parent=1 // pred_fallthru
      _
    // Predicated region
    $region6: #{tpu_custom_call.1} parent=1 // pred_check
      _
    $region7: #{tpu_custom_call.1} parent=1 // pred_check_branch
      %23 = sbr.rel (0) target = $region9
    $region8: #{tpu_custom_call.1} parent=1 // pred_region
      _
    $region9: #{tpu_custom_call.1} parent=1 // pred_fallthru
      _
    // Predicated region
    $region10: #{tpu_custom_call.1} parent=1 // pred_check
      _
    $region11: #{tpu_custom_call.1} parent=1 // pred_check_branch
      %25 = sbr.rel (0) target = $region13
    $region12: #{tpu_custom_call.1} parent=1 // pred_region
      _
    $region13: #{tpu_custom_call.1} parent=1 // pred_fallthru
      _
    // Predicated region
    $region14: #{tpu_custom_call.1} parent=1 // pred_check
      _
    $region15: #{tpu_custom_call.1} parent=1 // pred_check_branch
      %27 = sbr.rel (0) target = $region17
    $region16: #{tpu_custom_call.1} parent=1 // pred_region
      %28 = dma.done [#allocation3], 256
    $region17: #{tpu_custom_call.1} parent=1 // pred_fallthru
      _
    %v29 = vld [vmem:[#allocation2] sm:$0xff]
    %v30 = vld [vmem:[#allocation2 + $0x8] sm:$0xff]
    %v31 = vld [vmem:[%s1] sm:$0x1]
    %v33 = vlaneseq
    %v34 = vshrl.u32 %v33, 7
    %v35 = vsub.s32 0, %v34
    %v36 = vrot.slane %v31, %v35
    %v38 = vmul.f32 %v29, %v36
    %v39 = vmul.f32 %v30, %v36
    %vm40 = vcmask 261120
    %v41 = vsel %vm40, %v38, 0.0
    %42 = vadd.xlane.f32.xlu0 %v41
    %v43 = vpop.xlane.xlu0 %42
    %v44 = vsel %vm40, %v39, 0.0
    %45 = vadd.xlane.f32.xlu0 %v44
    %v46 = vpop.xlane.xlu0 %45
    %v47 = vld [vmem:[%s2] sm:$0x3]
    %vm48 = vcmp.ne.s32.totalorder %v47, 0
    %v51 = vlaneseq
    %v52 = vand.u32 %v51, 127
    %v53 = vlaneseq
    %v54 = vshrl.u32 %v53, 7
    %v55 = vsub.s32 %v52, %v54
    %v56 = vrot.slane %v43, %v55
    %v57 = vlaneseq
    %v58 = vshrl.u32 %v57, 7
    %v59 = vsub.s32 %v52, %v58
    %v60 = vrot.slane %v46, %v59
    %vm61 = vcmask 1041409
    %v62 = vsel %vm61, %v60, %v56
    %v64 = vsel %vm48, -inf, %v62
    %vm65 = vcmask 58368
    %v66 = vsel %vm65, %v64, -inf
    %67 = vmax.xlane.f32.xlu0 %v66
    %v68 = vpop.xlane.xlu0 %67
    %v69 = vsub.f32 %v64, %v68
    %v70 = vmul.f32 %v69, 1.442695
    %v71 = vpow.pop %v70
    %v72 = vsel %vm65, %v71, 0.0
    %73 = vadd.xlane.f32.xlu0 %v72
    %v74 = vpop.xlane.xlu0 %73
    %v75 = vrcp.pop %v74
    %v76 = vmul.f32 %v71, %v75
    %77 = vst.msk [vmem:[#allocation5] sm:$0x3] %vm65, %v76
    // Predicated region
    $region18: #{tpu_custom_call.1} parent=1 // pred_check
      _
    $region19: #{tpu_custom_call.1} parent=1 // pred_check_branch
      %79 = sbr.rel (0) target = $region21
    $region20: #{tpu_custom_call.1} parent=1 // pred_region
      %s81 = ssub.s32 32, 32
      %82 = vsyncadd [#allocation4], %s81
      %s84 = sshll.u32 [#allocation5], 4
      %s85 = int_to_ptr.vmem [resolvable:$true] %s84
      %87 = dma.vmem_to_hbm [thread:$0]  %s85, 32, %s3, [#allocation4]
    $region21: #{tpu_custom_call.1} parent=1 // pred_fallthru
      _
    // Predicated region
    $region22: #{tpu_custom_call.1} parent=1 // pred_check
      _
    $region23: #{tpu_custom_call.1} parent=1 // pred_check_branch
      %89 = sbr.rel (0) target = $region25
    $region24: #{tpu_custom_call.1} parent=1 // pred_region
      %90 = dma.done [#allocation4], 32
    $region25: #{tpu_custom_call.1} parent=1 // pred_fallthru
      _
    %91 = vsyncpa [#allocation3], 1
    %92 = vsyncpa [#allocation4], 1

</llo_original>
